<compile_context>
chip_gen: v5e
topology: v5e:2x2
jax: 0.10.0
libtpu: 0.0.40
codegen_flags: <defaults>
</compile_context>

<pallas_src>
import functools

import jax
import jax.numpy as jnp
from jax import lax
from jax.experimental import pallas as pl
from jax.experimental.pallas import tpu as pltpu


def _scalenorm_kernel(scale_ref, x_ref, o_ref, *, eps):
    # x_ref block: (1, C, TILE_HW); scale_ref: SMEM f32[1]
    xf = x_ref[...].astype(jnp.float32)                     # (1, C, T)
    sq = jnp.sum(xf * xf, axis=1, keepdims=True)            # (1, 1, T)
    # scale / clamp(sqrt(sq), eps)  ==  scale * rsqrt(max(sq, eps^2))
    inv = scale_ref[0] * lax.rsqrt(jnp.maximum(sq, eps * eps))
    o_ref[...] = (xf * inv).astype(o_ref.dtype)             # broadcast over C


def _choose_tile_hw(C, hw, itemsize, *, max_tile=2048, vmem_budget_bytes=32 << 20):
    """Largest spatial tile (multiple of 128) whose pipeline footprint fits budget."""
    hw_pad128 = ((hw + 127) // 128) * 128
    # Per lane-column bytes: input+output double-buffered (2 arrays x 2 bufs)
    # at the native itemsize, plus ~2 f32 temporaries inside the kernel body.
    per_lane = C * (4 * itemsize + 8)
    tile = (vmem_budget_bytes // per_lane) // 128 * 128
    tile = max(128, min(tile, max_tile, hw_pad128))
    return int(tile)


def scale_norm(x, scale, eps=1e-5, *, tile_hw=None):
    """Pallas ScaleNorm. x: (B, C, H, W); L2 norm over axis=1 (per pixel)."""
    B, C, H, W = x.shape
    HW = H * W
    itemsize = jnp.dtype(x.dtype).itemsize

    if tile_hw is None:
        tile_hw = _choose_tile_hw(C, HW, itemsize)
    hw_pad = ((HW + tile_hw - 1) // tile_hw) * tile_hw

    # Lane-dense layout: (B, C, H*W), padded so last dim is a multiple of tile_hw.
    x2 = x.reshape(B, C, HW)
    if hw_pad != HW:
        x2 = jnp.pad(x2, ((0, 0), (0, 0), (0, hw_pad - HW)))

    # Scale as an SMEM scalar (no baked constant, works for traced params).
    scale_arr = jnp.asarray(scale, dtype=jnp.float32).reshape((1,))

    kernel = functools.partial(_scalenorm_kernel, eps=float(eps))

    out2 = pl.pallas_call(
        kernel,
        out_shape=jax.ShapeDtypeStruct((B, C, hw_pad), x.dtype),
        grid_spec=pltpu.PrefetchScalarGridSpec(
            num_scalar_prefetch=0,
            grid=(B, hw_pad // tile_hw),
            in_specs=[
                pl.BlockSpec(memory_space=pltpu.MemorySpace.SMEM),      # scale
                pl.BlockSpec((1, C, tile_hw), lambda b, s: (b, 0, s)),  # x tile
            ],
            out_specs=pl.BlockSpec((1, C, tile_hw), lambda b, s: (b, 0, s)),
        ),
        compiler_params=pltpu.CompilerParams(
            dimension_semantics=("parallel", "parallel"),
            vmem_limit_bytes=48 * 1024 * 1024,  # above 32 MiB default, < v7x 64 MiB
        ),
    )(scale_arr, x2)

    if hw_pad != HW:
        out2 = out2[:, :, :HW]
    return out2.reshape(B, C, H, W)


def scale_norm_ref(x, scale, eps=1e-5):
    """Pure-JAX reference mirroring the PyTorch forward."""
    xf = x.astype(jnp.float32)
    nrm = jnp.sqrt(jnp.sum(xf * xf, axis=1, keepdims=True))
    nrm = jnp.maximum(nrm, eps)
    return (xf * (jnp.float32(scale) / nrm)).astype(x.dtype)


if __name__ == "__main__":
    key = jax.random.PRNGKey(0)
    B, C, H, W = 2, 4, 16, 16
    x = jax.random.normal(key, (B, C, H, W), dtype=jnp.float32)

    # Deterministic "parameters": scale is a scalar hyperparameter in __init__
    # (commonly sqrt(feature_dim)); eps as in the module default.
    scale = float(jnp.sqrt(jnp.float32(C)))
    eps = 1e-5

    out = scale_norm(x, scale, eps)
    out = jax.block_until_ready(out)

    ref = scale_norm_ref(x, scale, eps)
    assert out.shape == x.shape and out.dtype == x.dtype
    assert jnp.allclose(out, ref, atol=2e-5, rtol=1e-5)

    print("KERNEL_OK")
</pallas_src>

<mosaic_0001>
module attributes {stable_mosaic.version = 11 : i64} {
  func.func @_scalenorm_kernel(%arg0: i32, %arg1: i32, %arg2: memref<1xf32, #tpu.memory_space<smem>>, %arg3: memref<1x4x256xf32, #tpu.memory_space<vmem>>, %arg4: memref<1x4x256xf32, #tpu.memory_space<vmem>>) attributes {dimension_semantics = [#tpu.dimension_semantics<parallel>, #tpu.dimension_semantics<parallel>], iteration_bounds = array<i64: 2, 1>, scalar_prefetch = 0 : i64, scratch_operands = 0 : i64, tpu.core_type = #tpu.core_type<tc>, window_params = [{transform_indices = @transform_0, window_bounds = array<i64: 1>}, {transform_indices = @transform_1, window_bounds = array<i64: 1, 4, 256>}, {transform_indices = @transform_2, window_bounds = array<i64: 1, 4, 256>}]} {
    %c0 = arith.constant 0 : index
    %c0_0 = arith.constant 0 : index
    %c0_1 = arith.constant 0 : index
    %0 = vector.load %arg3[%c0, %c0_0, %c0_1] : memref<1x4x256xf32, #tpu.memory_space<vmem>>, vector<1x4x256xf32>
    %1 = arith.mulf %0, %0 : vector<1x4x256xf32>
    %cst = arith.constant dense<0.000000e+00> : vector<1x256xf32>
    %2 = vector.multi_reduction <add>, %1, %cst [1] : vector<1x4x256xf32> to vector<1x256xf32>
    %3 = vector.shape_cast %2 : vector<1x256xf32> to vector<1x1x256xf32>
    %c0_2 = arith.constant 0 : index
    %4 = memref.load %arg2[%c0_2] : memref<1xf32, #tpu.memory_space<smem>>
    %cst_3 = arith.constant 1.000000e-10 : f32
    %5 = vector.broadcast %cst_3 : f32 to vector<1x1x256xf32>
    %6 = arith.maximumf %3, %5 : vector<1x1x256xf32>
    %7 = math.rsqrt %6 : vector<1x1x256xf32>
    %8 = vector.broadcast %4 : f32 to vector<1x1x256xf32>
    %9 = arith.mulf %8, %7 : vector<1x1x256xf32>
    %10 = vector.broadcast %9 : vector<1x1x256xf32> to vector<1x4x256xf32>
    %11 = arith.mulf %0, %10 : vector<1x4x256xf32>
    %c0_4 = arith.constant 0 : index
    %c0_5 = arith.constant 0 : index
    %c0_6 = arith.constant 0 : index
    %12 = vector.load %arg4[%c0_4, %c0_5, %c0_6] : memref<1x4x256xf32, #tpu.memory_space<vmem>>, vector<1x4x256xf32>
    tpu.vector_store %arg4[%c0_4, %c0_5, %c0_6], %11 {strides = array<i32>} : memref<1x4x256xf32, #tpu.memory_space<vmem>>, vector<1x4x256xf32>,
    return
  }
  func.func @transform_0(%arg0: i32, %arg1: i32) -> i32 {
    %c0_i32 = arith.constant 0 : i32
    %c0_i32_0 = arith.constant 0 : i32
    return %c0_i32 : i32
  }
  func.func @transform_1(%arg0: i32, %arg1: i32) -> (i32, i32, i32) {
    %c0_i32 = arith.constant 0 : i32
    %c0_i32_0 = arith.constant 0 : i32
    return %arg0, %c0_i32, %arg1 : i32, i32, i32
  }
  func.func @transform_2(%arg0: i32, %arg1: i32) -> (i32, i32, i32) {
    %c0_i32 = arith.constant 0 : i32
    %c0_i32_0 = arith.constant 0 : i32
    return %arg0, %c0_i32, %arg1 : i32, i32, i32
  }
}

</mosaic_0001>

<llo_original>
// kernel: tpu_custom_call.1
$region0: #{tpu_custom_call.1}
  #allocation0 [shape = 'u32[]', space=smem, size = 0x4, offset = 0x4, fixed_abs, tag = 'smem constant byte address 0x4 - core index']
  #allocation1 [shape = 'u32[72,128]{1,0:T(1,128)}', space=vmem, size = 0x9000, scoped, tag = 'internal scratch']
  #allocation2 [shape = 'f32[1]{0:T(128)S(6)}', space=smem, size = 0x200, scoped, tag = 'scoped memory for tpu_custom_call.1']
  %s0 = inlined_call_operand.<no memory space> [shape: f32[1], index: 0, kind: input, shape index: {}]
  %s1 = inlined_call_operand.hbm [shape: f32[2,4,256], index: 1, kind: input, shape index: {}]
  %s2 = inlined_call_operand.hbm [shape: f32[2,4,256], index: 2, kind: output, shape index: {}]
  %s3 = sld [smem:[#allocation0]]
  $region45: #{tpu_custom_call.1} parent=0
    _
  %s5 = ssub.s32 1, %s3
  %s6 = scalar_select 0, %s5, %s3
  %7 = sst [smem:[#allocation2]] %s0
  $region1: #{tpu_custom_call.1} parent=0
    #allocation3 [shape = 'u8[8192]{0}', space=vmem, size = 0x2000, scoped, tag = 'input window, operand 1']
    #allocation4 [shape = 's32[2]{0}', space=sflag, size = 0x8, scoped, tag = 'scoped memory for tpu_custom_call.1']
    #allocation5 [shape = 's32[2]{0}', space=sflag, size = 0x8, scoped, tag = 'scoped memory for tpu_custom_call.1']
    #allocation6 [shape = 'u8[8192]{0}', space=vmem, size = 0x2000, scoped, tag = 'output window, operand 0']
    %8 = vsyncpa [#allocation4], 0
    %s9 = scalar_lea.sflag [#allocation4], 1
    %10 = vsyncpa %s9, 0
    %11 = vsyncpa [#allocation5], 0
    %s12 = scalar_lea.sflag [#allocation5], 1
    %13 = vsyncpa %s12, 0
    loop: start=0, step=1, limit=4
    $region2: #{tpu_custom_call.1} parent=1 // loop_pre_header
      _
    $region3: #{tpu_custom_call.1} parent=1 // loop_header
      %s15 = sphi 0, %s19
      %p16 = scmp.ge.s32.totalorder %s15, 4
      %s22 = sphi 0, %s34
      %s23 = sphi 0, %s30
      %s24 = sphi 0, %s22
      %s25 = sphi 0, %s23
      %s26 = sphi 0, %s24
      %s27 = sphi 0, %s25
      %s35 = sphi 0, %s35
      %s37 = sphi 0, %s35
      %s38 = sphi 0, %s37
      %s52 = sphi 0, %s38
      %s60 = sphi 0, %s62
      %s63 = sphi 0, %s60
      %s64 = sphi 0, %s63
      %s80 = sphi 0, %s64
      %s88 = sphi 0, %s90
      %s91 = sphi 0, %s88
      %s92 = sphi 0, %s91
      %s108 = sphi 0, %s92
    $region4: #{tpu_custom_call.1} parent=1 // loop_header_branch
      %18 = sbr.rel (%p16) target = $region8
    $region5: #{tpu_custom_call.1} parent=1 // loop_body
      %s20 = ssub.s32 %s15, 1
      %s21 = ssub.s32 %s15, 2
      %s28 = sadd.s32 1, %s23
      %p29 = scmp.ge.s32.totalorder %s28, 1
      %s30 = scalar_select %p29, 0, %s28
      %s31 = sadd.s32 1, %s22
      %s32 = scalar_select %p29, %s31, %s22
      %p33 = scmp.ge.s32.totalorder %s32, 2
      %s34 = scalar_select %p33, 0, %s32
      %s36 = sadd.s32 %s35, 1
      %p39 = scmp.eq.s32.totalorder %s15, 1
      %p40 = scmp.ne.s32.totalorder %s35, %s37
      %p41 = scmp.eq.s32.totalorder %s15, 0
      %p42 = por %p40, %p41
      %p43 = scmp.ne.s32.totalorder %s35, %s37
      %p44 = scmp.eq.s32.totalorder %s20, 1
      %p45 = por %p43, %p44
      %p46 = scmp.ne.s32.totalorder %s37, %s38
      %p47 = scmp.eq.s32.totalorder %s20, 0
      %p48 = por %p46, %p47
      %p49 = scmp.ne.s32.totalorder %s37, %s38
      %p50 = scmp.eq.s32.totalorder %s21, 1
      %p51 = por %p49, %p50
      %p53 = scmp.ne.s32.totalorder %s38, %s52
      %p54 = scmp.eq.s32.totalorder %s21, 0
      %p55 = por %p53, %p54
      %s56 = ssub.s32 %s22, %s34
      %s57 = ssub.s32 %s23, %s30
      %s58 = sor.u32 %s56, %s57
      %p59 = scmp.eq.s32.totalorder %s58, 0
      %s61 = sadd.s32 %s60, 1
      %s62 = scalar_select %p59, %s60, %s61
      %p65 = pneg %p59
      %p66 = scmp.eq.s32.totalorder %s15, 1
      %p67 = por %p65, %p66
      %p68 = scmp.ne.s32.totalorder %s60, %s63
      %p69 = scmp.eq.s32.totalorder %s15, 0
      %p70 = por %p68, %p69
      %p71 = scmp.ne.s32.totalorder %s60, %s63
      %p72 = scmp.eq.s32.totalorder %s20, 1
      %p73 = por %p71, %p72
      %p74 = scmp.ne.s32.totalorder %s63, %s64
      %p75 = scmp.eq.s32.totalorder %s20, 0
      %p76 = por %p74, %p75
      %p77 = scmp.ne.s32.totalorder %s63, %s64
      %p78 = scmp.eq.s32.totalorder %s21, 1
      %p79 = por %p77, %p78
      %p81 = scmp.ne.s32.totalorder %s64, %s80
      %p82 = scmp.eq.s32.totalorder %s21, 0
      %p83 = por %p81, %p82
      %s84 = ssub.s32 %s22, %s34
      %s85 = ssub.s32 %s23, %s30
      %s86 = sor.u32 %s84, %s85
      %p87 = scmp.eq.s32.totalorder %s86, 0
      %s89 = sadd.s32 %s88, 1
      %s90 = scalar_select %p87, %s88, %s89
      %p93 = pneg %p87
      %p94 = scmp.eq.s32.totalorder %s15, 1
      %p95 = por %p93, %p94
      %p96 = scmp.ne.s32.totalorder %s88, %s91
      %p97 = scmp.eq.s32.totalorder %s15, 0
      %p98 = por %p96, %p97
      %p99 = scmp.ne.s32.totalorder %s88, %s91
      %p100 = scmp.eq.s32.totalorder %s20, 1
      %p101 = por %p99, %p100
      %p102 = scmp.ne.s32.totalorder %s91, %s92
      %p103 = scmp.eq.s32.totalorder %s20, 0
      %p104 = por %p102, %p103
      %p105 = scmp.ne.s32.totalorder %s91, %s92
      %p106 = scmp.eq.s32.totalorder %s21, 1
      %p107 = por %p105, %p106
      %p109 = scmp.ne.s32.totalorder %s92, %s108
      %p110 = scmp.eq.s32.totalorder %s21, 0
      %p111 = por %p109, %p110
      %p112 = scmp.le.s32.totalorder 1, %s15
      %p113 = scmp.lt.s32.totalorder %s15, 3
      %p114 = pnand %p112, %p113
      %p115 = pneg %p114
      // Predicated region
      $region9: #{tpu_custom_call.1} parent=5 // pred_check
        _
      $region10: #{tpu_custom_call.1} parent=5 // pred_check_branch
        %117 = sbr.rel (%p114) target = $region12
      $region11: #{tpu_custom_call.1} parent=5 // pred_region
        %s118 = ssub.s32 %s15, 1
        // Predicated region
        $region13: #{tpu_custom_call.1} parent=11 // pred_check
          %p119 = pneg %p48
        $region14: #{tpu_custom_call.1} parent=11 // pred_check_branch
          %121 = sbr.rel (%p119) target = $region16
        $region15: #{tpu_custom_call.1} parent=11 // pred_region
          _
        $region16: #{tpu_custom_call.1} parent=11 // pred_fallthru
          _
      $region12: #{tpu_custom_call.1} parent=5 // pred_fallthru
        _
      %p122 = scmp.lt.s32.totalorder %s15, 2
      // Predicated region
      $region17: #{tpu_custom_call.1} parent=5 // pred_check
        %p123 = pneg %p122
      $region18: #{tpu_custom_call.1} parent=5 // pred_check_branch
        %125 = sbr.rel (%p123) target = $region20
      $region19: #{tpu_custom_call.1} parent=5 // pred_region
        // Predicated region
        $region21: #{tpu_custom_call.1} parent=19 // pred_check
          %p126 = pneg %p70
        $region22: #{tpu_custom_call.1} parent=19 // pred_check_branch
          %128 = sbr.rel (%p126) target = $region24
        $region23: #{tpu_custom_call.1} parent=19 // pred_region
          %s129 = sand.u32 %s60, 1
          %s130 = scalar_lea.sflag [#allocation4], %s129
          %s131 = sand.u32 %s60, 1
          %s132 = smul.addr %s131, 8
          %s133 = scalar_lea.vmem [#allocation3], %s132
          %s134 = smul.u32 2, %s23
          %136 = vsyncadd %s130, 0
          %s137 = smul.addr %s22, 2
          %s138 = sadd.s32 %s134, %s137
          %s139 = smul.addr %s138, 4
          %s140 = scalar_lea.hbm %s1, %s139
          %s142 = sshll.u32 %s140, 4
          %s143 = int_to_ptr.hbm [resolvable:$true] %s142
          %s144 = sshll.u32 %s133, 4
          %s145 = int_to_ptr.vmem [resolvable:$true] %s144
          %147 = dma.hbm_to_vmem [thread:$0]  %s143, 128, %s145, %s130
        $region24: #{tpu_custom_call.1} parent=19 // pred_fallthru
          _
      $region20: #{tpu_custom_call.1} parent=5 // pred_fallthru
        _
      %p148 = scmp.le.s32.totalorder 1, %s15
      %p149 = scmp.lt.s32.totalorder %s15, 3
      %p150 = pnand %p148, %p149
      %p151 = pneg %p150
      // Predicated region
      $region25: #{tpu_custom_call.1} parent=5 // pred_check
        _
      $region26: #{tpu_custom_call.1} parent=5 // pred_check_branch
        %153 = sbr.rel (%p150) target = $region28
      $region27: #{tpu_custom_call.1} parent=5 // pred_region
        %s154 = ssub.s32 %s15, 1
        %s155 = sand.u32 %s63, 1
        %s156 = scalar_lea.sflag [#allocation4], %s155
        %s157 = sand.u32 %s63, 1
        %s158 = smul.addr %s157, 8
        %s159 = scalar_lea.vmem [#allocation3], %s158
        // Predicated region
        $region29: #{tpu_custom_call.1} parent=27 // pred_check
          %p160 = pneg %p76
        $region30: #{tpu_custom_call.1} parent=27 // pred_check_branch
          %162 = sbr.rel (%p160) target = $region32
        $region31: #{tpu_custom_call.1} parent=27 // pred_region
          %164 = dma.done %s156, 128
        $region32: #{tpu_custom_call.1} parent=27 // pred_fallthru
          _
        %p165 = pneg %p48
        %p166 = pneg %p45
        %s167 = sand.u32 %s63, 1
        %s168 = scalar_lea.sflag [#allocation4], %s167
        %s169 = sand.u32 %s63, 1
        %s170 = smul.addr %s169, 8
        %s171 = scalar_lea.vmem [#allocation3], %s170
        %p172 = pneg %p76
        %p173 = pneg %p73
        %p174 = pneg %p104
        %p175 = pneg %p101
        %s176 = sand.u32 %s91, 1
        %s177 = scalar_lea.sflag [#allocation5], %s176
        %s178 = sand.u32 %s91, 1
        %s179 = smul.addr %s178, 8
        %s180 = scalar_lea.vmem [#allocation6], %s179
        %s181 = smul.u32 2, %s25
        %s182 = smul.u32 2, %s25
        %v183 = vld [vmem:[%s159] sm:$0xff]
        %v184 = vmul.f32 %v183, %v183
        %186 = vst [vmem:[#allocation1] ss:$2 sm:$0xff] %v184
        %v187 = vld.sshfl [vmem:[#allocation1] sm:$0xff pattern:$0x75316420]
        %v188 = vld.sshfl [vmem:[#allocation1 + $0x8] sm:$0xff pattern:$0x75316420]
        %vm191 = vcmask 1043456
        %v192 = vsel %vm191, %v187, 0.0
        %v193 = vrot.slane %v192, 4
        %v194 = vadd.f32 %v192, %v193
        %v195 = vrot.slane %v194, 2
        %v196 = vadd.f32 %v194, %v195
        %v197 = vrot.slane %v196, 1
        %v198 = vadd.f32 %v196, %v197
        %v199 = vsel %vm191, %v188, 0.0
        %v200 = vrot.slane %v199, 4
        %v201 = vadd.f32 %v199, %v200
        %v202 = vrot.slane %v201, 2
        %v203 = vadd.f32 %v201, %v202
        %v204 = vrot.slane %v203, 1
        %v205 = vadd.f32 %v203, %v204
        %s206 = sld [smem:[#allocation2]]
        %v207 = vmax.f32 %v198, 1e-10
        %v208 = vmax.f32 %v205, 1e-10
        %v209 = vrsqrt.pop %v207
        %v210 = vmul.f32 %v209, %v207
        %v211 = vmul.f32 %v210, %v209
        %v212 = vmul.f32 0.5, %v211
        %v213 = vsub.f32 1.5, %v212
        %v214 = vmul.f32 %v209, %v213
        %vm215 = vweird.f32 %v207
        %vm216 = vweird.f32 %v209
        %vm217 = vmor %vm215, %vm216
        %v218 = vsel %vm217, %v209, %v214
        %v219 = vrsqrt.pop %v208
        %v220 = vmul.f32 %v219, %v208
        %v221 = vmul.f32 %v220, %v219
        %v222 = vmul.f32 0.5, %v221
        %v223 = vsub.f32 1.5, %v222
        %v224 = vmul.f32 %v219, %v223
        %vm225 = vweird.f32 %v208
        %vm226 = vweird.f32 %v219
        %vm227 = vmor %vm225, %vm226
        %v228 = vsel %vm227, %v219, %v224
        %v229 = vstv %s206
        %v230 = vmul.f32 %v229, %v218
        %v231 = vmul.f32 %v229, %v228
        %v234 = vrot.slane %v231, 4
        %v235 = vsel %vm191, %v230, %v234
        %v237 = vmul.f32 %v183, %v235
        %238 = vst [vmem:[%s180] sm:$0xff] %v237
        %s239 = sand.u32 %s91, 1
        %s240 = scalar_lea.sflag [#allocation5], %s239
        %s241 = sand.u32 %s91, 1
        %s242 = smul.addr %s241, 8
        %s243 = scalar_lea.vmem [#allocation6], %s242
        // Predicated region
        $region33: #{tpu_custom_call.1} parent=27 // pred_check
          %p244 = pneg %p101
        $region34: #{tpu_custom_call.1} parent=27 // pred_check_branch
          %246 = sbr.rel (%p244) target = $region36
        $region35: #{tpu_custom_call.1} parent=27 // pred_region
          %s247 = smul.u32 2, %s25
          %249 = vsyncadd %s240, 0
          %s250 = smul.addr %s24, 2
          %s251 = sadd.s32 %s247, %s250
          %s252 = smul.addr %s251, 4
          %s253 = scalar_lea.hbm %s2, %s252
          %s255 = sshll.u32 %s243, 4
          %s256 = int_to_ptr.vmem [resolvable:$true] %s255
          %s257 = sshll.u32 %s253, 4
          %s258 = int_to_ptr.hbm [resolvable:$true] %s257
          %260 = dma.vmem_to_hbm [thread:$0]  %s256, 128, %s258, %s240
        $region36: #{tpu_custom_call.1} parent=27 // pred_fallthru
          _
      $region28: #{tpu_custom_call.1} parent=5 // pred_fallthru
        _
      %p261 = scmp.le.s32.totalorder 2, %s15
      // Predicated region
      $region37: #{tpu_custom_call.1} parent=5 // pred_check
        %p262 = pneg %p261
      $region38: #{tpu_custom_call.1} parent=5 // pred_check_branch
        %264 = sbr.rel (%p262) target = $region40
      $region39: #{tpu_custom_call.1} parent=5 // pred_region
        %s265 = ssub.s32 %s15, 2
        // Predicated region
        $region41: #{tpu_custom_call.1} parent=39 // pred_check
          %p266 = pneg %p107
        $region42: #{tpu_custom_call.1} parent=39 // pred_check_branch
          %268 = sbr.rel (%p266) target = $region44
        $region43: #{tpu_custom_call.1} parent=39 // pred_region
          %s269 = sand.u32 %s92, 1
          %s270 = scalar_lea.sflag [#allocation5], %s269
          %s271 = sand.u32 %s92, 1
          %s272 = smul.addr %s271, 8
          %s273 = scalar_lea.vmem [#allocation6], %s272
          %275 = dma.done %s270, 128
        $region44: #{tpu_custom_call.1} parent=39 // pred_fallthru
          _
      $region40: #{tpu_custom_call.1} parent=5 // pred_fallthru
        _
    $region6: #{tpu_custom_call.1} parent=1 // loop_footer
      %s19 = sadd.s32 1, %s15
    $region7: #{tpu_custom_call.1} parent=1 // loop_footer_branch
      %14 = sbr.rel target = $region3
    $region8: #{tpu_custom_call.1} parent=1 // loop_exit
      _
    %276 = vsyncpa [#allocation4], 1
    %s277 = scalar_lea.sflag [#allocation4], 1
    %278 = vsyncpa %s277, 1
    %279 = vsyncpa [#allocation5], 1
    %s280 = scalar_lea.sflag [#allocation5], 1
    %281 = vsyncpa %s280, 1

</llo_original>
